<compile_context>
chip_gen: v5e
topology: v5e:2x2
jax: 0.10.0
libtpu: 0.0.40
codegen_flags: <defaults>
</compile_context>

<pallas_src>
import jax
import jax.numpy as jnp
from jax import lax
from jax.experimental import pallas as pl
from jax.experimental.pallas import tpu as pltpu

# ----------------------------- configuration ---------------------------------
BATCH = 2
SEQ = 8
HIDDEN = 32
NUM_HEAD = 4
HEAD_DIM = HIDDEN // NUM_HEAD
LN_EPS = 1e-5

# weight-slab column offsets (each block starts on a 128-lane boundary)
W_QKV_OFF = 0          # (H, 3H)   = cols   0: 96
W_FC_OFF = 128         # (H, H)    = cols 128:160
W_F1_OFF = 256         # (H, H)    = cols 256:288
W_F2_OFF = 384         # (H, H)    = cols 384:416
WSLAB_COLS = 512


def _layer_norm(v, gamma, beta, eps=LN_EPS):
    mu = jnp.mean(v, axis=-1, keepdims=True)
    var = jnp.mean((v - mu) ** 2, axis=-1, keepdims=True)
    return (v - mu) * jax.lax.rsqrt(var + eps) * gamma + beta


# ------------------------------- Pallas kernel --------------------------------
def mha_kernel(x_ref, w_ref, c_ref, mask_ref, o_ref):
    x = x_ref[...]                                              # (B*S, H) f32

    # --- fused Q/K/V projection (one MXU matmul); 1/sqrt(hd) pre-folded into Q cols/bias ---
    wqkv = w_ref[:, W_QKV_OFF:W_QKV_OFF + 3 * HIDDEN]           # (H, 3H)
    bqkv = c_ref[0:1, 0:3 * HIDDEN]                             # (1, 3H)
    qkv = jnp.dot(x, wqkv, preferred_element_type=jnp.float32) + bqkv
    q = qkv[:, 0:HIDDEN]
    k = qkv[:, HIDDEN:2 * HIDDEN]
    v = qkv[:, 2 * HIDDEN:3 * HIDDEN]

    mask = mask_ref[...]                                        # (B*S, B*S), 0 / -1e30 additive

    # --- per-head attention; contexts concatenated, single output-projection matmul ---
    ctx_parts = []
    for h in range(NUM_HEAD):
        lo = h * HEAD_DIM
        hi = lo + HEAD_DIM
        qh = q[:, lo:hi]                                        # (B*S, hd), already scaled
        kh = k[:, lo:hi]
        vh = v[:, lo:hi]
        # qh @ kh^T without materializing a transpose
        s = lax.dot_general(qh, kh,
                            dimension_numbers=(((1,), (1,)), ((), ())),
                            preferred_element_type=jnp.float32)  # (B*S, B*S)
        s = s + mask                                            # block-diagonal batch mask
        s = s - jnp.max(s, axis=-1, keepdims=True)
        p = jnp.exp(s)
        p = p * pl.reciprocal(jnp.sum(p, axis=-1, keepdims=True), approx=False)
        ctx_parts.append(jnp.dot(p, vh, preferred_element_type=jnp.float32))  # (B*S, hd)
    ctx = jnp.concatenate(ctx_parts, axis=1)                    # (B*S, H) head concat

    # --- output projection + residual + LayerNorm ---
    wfc = w_ref[:, W_FC_OFF:W_FC_OFF + HIDDEN]
    bfc = c_ref[1:2, 0:HIDDEN]
    attn_out = jnp.dot(ctx, wfc, preferred_element_type=jnp.float32) + bfc
    ln1g = c_ref[4:5, 0:HIDDEN]
    ln1b = c_ref[5:6, 0:HIDDEN]
    y1 = _layer_norm(attn_out + x, ln1g, ln1b)

    # --- FFN: ln(y1 + fc2(relu(fc1(y1)))) ---
    wf1 = w_ref[:, W_F1_OFF:W_F1_OFF + HIDDEN]
    bf1 = c_ref[2:3, 0:HIDDEN]
    wf2 = w_ref[:, W_F2_OFF:W_F2_OFF + HIDDEN]
    bf2 = c_ref[3:4, 0:HIDDEN]
    h1 = jnp.dot(y1, wf1, preferred_element_type=jnp.float32) + bf1
    h1 = jnp.maximum(h1, 0.0)
    h2 = jnp.dot(h1, wf2, preferred_element_type=jnp.float32) + bf2
    ln2g = c_ref[6:7, 0:HIDDEN]
    ln2b = c_ref[7:8, 0:HIDDEN]
    out = _layer_norm(y1 + h2, ln2g, ln2b)

    o_ref[...] = out.astype(o_ref.dtype)


# ------------------------------- wrapper --------------------------------------
@jax.jit
def mha_forward(x, wslab, cslab, mask):
    B, S, H = x.shape
    BS = B * S
    xf = x.reshape(BS, H)
    vmem = pl.BlockSpec(memory_space=pltpu.MemorySpace.VMEM)
    out_flat = pl.pallas_call(
        mha_kernel,
        out_shape=jax.ShapeDtypeStruct((BS, H), x.dtype),
        in_specs=[vmem, vmem, vmem, vmem],
        out_specs=vmem,
    )(xf, wslab, cslab, mask)
    return out_flat.reshape(B, S, H)


# --------------------------- one-time parameter packing ------------------------
def pack_params(params):
    """Pack the 13 raw parameters into two lane-dense slabs + an additive batch mask.
    Called once at init; the per-call path sees only pre-packed arrays."""
    H = HIDDEN
    inv_scale = 1.0 / (HEAD_DIM ** 0.5)

    wslab = jnp.zeros((H, WSLAB_COLS), jnp.float32)
    wslab = wslab.at[:, W_QKV_OFF + 0 * H:W_QKV_OFF + 1 * H].set(params["wq"] * inv_scale)
    wslab = wslab.at[:, W_QKV_OFF + 1 * H:W_QKV_OFF + 2 * H].set(params["wk"])
    wslab = wslab.at[:, W_QKV_OFF + 2 * H:W_QKV_OFF + 3 * H].set(params["wv"])
    wslab = wslab.at[:, W_FC_OFF:W_FC_OFF + H].set(params["wfc"])
    wslab = wslab.at[:, W_F1_OFF:W_F1_OFF + H].set(params["wf1"])
    wslab = wslab.at[:, W_F2_OFF:W_F2_OFF + H].set(params["wf2"])

    cslab = jnp.zeros((8, 128), jnp.float32)
    cslab = cslab.at[0, 0 * H:1 * H].set(params["bq"][0] * inv_scale)
    cslab = cslab.at[0, 1 * H:2 * H].set(params["bk"][0])
    cslab = cslab.at[0, 2 * H:3 * H].set(params["bv"][0])
    cslab = cslab.at[1, 0:H].set(params["bfc"][0])
    cslab = cslab.at[2, 0:H].set(params["bf1"][0])
    cslab = cslab.at[3, 0:H].set(params["bf2"][0])
    cslab = cslab.at[4, 0:H].set(params["ln1g"][0])
    cslab = cslab.at[5, 0:H].set(params["ln1b"][0])
    cslab = cslab.at[6, 0:H].set(params["ln2g"][0])
    cslab = cslab.at[7, 0:H].set(params["ln2b"][0])

    # additive block-diagonal batch mask: 0 within a batch element, -1e30 across
    bs = BATCH * SEQ
    row_b = jnp.arange(bs)[:, None] // SEQ
    col_b = jnp.arange(bs)[None, :] // SEQ
    mask = jnp.where(row_b == col_b, 0.0, -1e30).astype(jnp.float32)

    return wslab, cslab, mask


# ---------------------------- plain-JAX reference ------------------------------
def mha_reference(x, params):
    B, S, H = x.shape
    q = x @ params["wq"] + params["bq"]
    k = x @ params["wk"] + params["bk"]
    v = x @ params["wv"] + params["bv"]

    def split(t):  # (B, S, H) -> (B, nh, S, hd)
        return t.reshape(B, S, NUM_HEAD, HEAD_DIM).transpose(0, 2, 1, 3)

    qh, kh, vh = split(q), split(k), split(v)
    scores = jnp.einsum("bhqd,bhkd->bhqk", qh, kh) / (HEAD_DIM ** 0.5)
    attn = jax.nn.softmax(scores, axis=-1)
    ctx = jnp.einsum("bhqk,bhkd->bhqd", attn, vh)
    ctx = ctx.transpose(0, 2, 1, 3).reshape(B, S, H)
    ctx = ctx @ params["wfc"] + params["bfc"]
    ctx = _layer_norm(ctx + x, params["ln1g"], params["ln1b"])
    h1 = jnp.maximum(ctx @ params["wf1"] + params["bf1"], 0.0)
    h2 = h1 @ params["wf2"] + params["bf2"]
    return _layer_norm(ctx + h2, params["ln2g"], params["ln2b"])


# ------------------------------- params init ----------------------------------
def init_params(key, hidden):
    names_w = ["wq", "wk", "wv", "wfc", "wf1", "wf2"]
    names_b = ["bq", "bk", "bv", "bfc", "bf1", "bf2"]
    keys = jax.random.split(key, len(names_w) + len(names_b))
    params = {}
    bound = 1.0 / (hidden ** 0.5)
    for i, n in enumerate(names_w):
        # stored as (in, out), i.e. already transposed vs. nn.Linear's (out, in)
        params[n] = jax.random.uniform(keys[i], (hidden, hidden),
                                       jnp.float32, -bound, bound)
    for i, n in enumerate(names_b):
        params[n] = jax.random.uniform(keys[len(names_w) + i], (1, hidden),
                                       jnp.float32, -bound, bound)
    # LayerNorm params (PyTorch default init: weight=1, bias=0)
    params["ln1g"] = jnp.ones((1, hidden), jnp.float32)
    params["ln1b"] = jnp.zeros((1, hidden), jnp.float32)
    params["ln2g"] = jnp.ones((1, hidden), jnp.float32)
    params["ln2b"] = jnp.zeros((1, hidden), jnp.float32)
    return params


if __name__ == "__main__":
    key = jax.random.PRNGKey(0)
    kx, kp = jax.random.split(key)
    x = jax.random.normal(kx, (BATCH, SEQ, HIDDEN), jnp.float32)
    params = init_params(kp, HIDDEN)

    # one-time packing (off the per-call path)
    wslab, cslab, mask = pack_params(params)
    wslab, cslab, mask = jax.block_until_ready((wslab, cslab, mask))

    out = mha_forward(x, wslab, cslab, mask)
    out = jax.block_until_ready(out)

    ref = mha_reference(x, params)
    assert out.shape == (BATCH, SEQ, HIDDEN)
    assert jnp.allclose(out, ref, atol=1e-4, rtol=1e-4), (
        f"max abs err {jnp.max(jnp.abs(out - ref))}")

    print("KERNEL_OK")
</pallas_src>

<mosaic_0001>
module attributes {stable_mosaic.version = 11 : i64} {
  func.func @mha_kernel(%arg0: memref<16x32xf32, #tpu.memory_space<vmem>>, %arg1: memref<32x512xf32, #tpu.memory_space<vmem>>, %arg2: memref<8x128xf32, #tpu.memory_space<vmem>>, %arg3: memref<16x16xf32, #tpu.memory_space<vmem>>, %arg4: memref<16x32xf32, #tpu.memory_space<vmem>>) attributes {dimension_semantics = [], scalar_prefetch = 0 : i64, scratch_operands = 0 : i64, tpu.core_type = #tpu.core_type<tc>} {
    %c0 = arith.constant 0 : index
    %c0_0 = arith.constant 0 : index
    %0 = vector.load %arg0[%c0, %c0_0] : memref<16x32xf32, #tpu.memory_space<vmem>>, vector<16x32xf32>
    %c0_1 = arith.constant 0 : index
    %c0_2 = arith.constant 0 : index
    %1 = vector.load %arg1[%c0_1, %c0_2] : memref<32x512xf32, #tpu.memory_space<vmem>>, vector<32x96xf32>
    %c0_3 = arith.constant 0 : index
    %c0_4 = arith.constant 0 : index
    %2 = vector.load %arg2[%c0_3, %c0_4] : memref<8x128xf32, #tpu.memory_space<vmem>>, vector<1x96xf32>
    %cst = arith.constant dense<0.000000e+00> : vector<16x96xf32>
    %3 = tpu.matmul %0, %1, %cst {dimension_numbers = #tpu.dot_dimension_numbers<[1], [0], [0], [1], [0, 0, 1, 1], [], []>} : vector<16x32xf32>, vector<32x96xf32>, vector<16x96xf32> -> vector<16x96xf32>
    %4 = vector.broadcast %2 : vector<1x96xf32> to vector<16x96xf32>
    %5 = arith.addf %3, %4 : vector<16x96xf32>
    %6 = vector.extract_strided_slice %5 {offsets = [0, 0], sizes = [16, 32], strides = [1, 1]} : vector<16x96xf32> to vector<16x32xf32>
    %7 = vector.extract_strided_slice %5 {offsets = [0, 32], sizes = [16, 32], strides = [1, 1]} : vector<16x96xf32> to vector<16x32xf32>
    %8 = vector.extract_strided_slice %5 {offsets = [0, 64], sizes = [16, 32], strides = [1, 1]} : vector<16x96xf32> to vector<16x32xf32>
    %c0_5 = arith.constant 0 : index
    %c0_6 = arith.constant 0 : index
    %9 = vector.load %arg3[%c0_5, %c0_6] : memref<16x16xf32, #tpu.memory_space<vmem>>, vector<16x16xf32>
    %10 = vector.extract_strided_slice %6 {offsets = [0, 0], sizes = [16, 8], strides = [1, 1]} : vector<16x32xf32> to vector<16x8xf32>
    %11 = vector.extract_strided_slice %7 {offsets = [0, 0], sizes = [16, 8], strides = [1, 1]} : vector<16x32xf32> to vector<16x8xf32>
    %12 = vector.extract_strided_slice %8 {offsets = [0, 0], sizes = [16, 8], strides = [1, 1]} : vector<16x32xf32> to vector<16x8xf32>
    %cst_7 = arith.constant dense<0.000000e+00> : vector<16x16xf32>
    %13 = tpu.matmul %10, %11, %cst_7 {dimension_numbers = #tpu.dot_dimension_numbers<[1], [1], [0], [0], [0, 0, 1, 0], [], []>} : vector<16x8xf32>, vector<16x8xf32>, vector<16x16xf32> -> vector<16x16xf32>
    %14 = arith.addf %13, %9 : vector<16x16xf32>
    %cst_8 = arith.constant dense<0xFF800000> : vector<16xf32>
    %15 = vector.multi_reduction <maximumf>, %14, %cst_8 [1] : vector<16x16xf32> to vector<16xf32>
    %16 = vector.shape_cast %15 : vector<16xf32> to vector<16x1xf32>
    %17 = vector.broadcast %16 : vector<16x1xf32> to vector<16x16xf32>
    %18 = arith.subf %14, %17 : vector<16x16xf32>
    %19 = math.exp %18 : vector<16x16xf32>
    %cst_9 = arith.constant dense<0.000000e+00> : vector<16xf32>
    %20 = vector.multi_reduction <add>, %19, %cst_9 [1] : vector<16x16xf32> to vector<16xf32>
    %21 = vector.shape_cast %20 : vector<16xf32> to vector<16x1xf32>
    %22 = tpu.reciprocal %21 : vector<16x1xf32> -> vector<16x1xf32>
    %23 = vector.broadcast %22 : vector<16x1xf32> to vector<16x16xf32>
    %24 = arith.mulf %19, %23 : vector<16x16xf32>
    %cst_10 = arith.constant dense<0.000000e+00> : vector<16x8xf32>
    %25 = tpu.matmul %24, %12, %cst_10 {dimension_numbers = #tpu.dot_dimension_numbers<[1], [0], [0], [1], [0, 0, 1, 1], [], []>} : vector<16x16xf32>, vector<16x8xf32>, vector<16x8xf32> -> vector<16x8xf32>
    %26 = vector.extract_strided_slice %6 {offsets = [0, 8], sizes = [16, 8], strides = [1, 1]} : vector<16x32xf32> to vector<16x8xf32>
    %27 = vector.extract_strided_slice %7 {offsets = [0, 8], sizes = [16, 8], strides = [1, 1]} : vector<16x32xf32> to vector<16x8xf32>
    %28 = vector.extract_strided_slice %8 {offsets = [0, 8], sizes = [16, 8], strides = [1, 1]} : vector<16x32xf32> to vector<16x8xf32>
    %cst_11 = arith.constant dense<0.000000e+00> : vector<16x16xf32>
    %29 = tpu.matmul %26, %27, %cst_11 {dimension_numbers = #tpu.dot_dimension_numbers<[1], [1], [0], [0], [0, 0, 1, 0], [], []>} : vector<16x8xf32>, vector<16x8xf32>, vector<16x16xf32> -> vector<16x16xf32>
    %30 = arith.addf %29, %9 : vector<16x16xf32>
    %cst_12 = arith.constant dense<0xFF800000> : vector<16xf32>
    %31 = vector.multi_reduction <maximumf>, %30, %cst_12 [1] : vector<16x16xf32> to vector<16xf32>
    %32 = vector.shape_cast %31 : vector<16xf32> to vector<16x1xf32>
    %33 = vector.broadcast %32 : vector<16x1xf32> to vector<16x16xf32>
    %34 = arith.subf %30, %33 : vector<16x16xf32>
    %35 = math.exp %34 : vector<16x16xf32>
    %cst_13 = arith.constant dense<0.000000e+00> : vector<16xf32>
    %36 = vector.multi_reduction <add>, %35, %cst_13 [1] : vector<16x16xf32> to vector<16xf32>
    %37 = vector.shape_cast %36 : vector<16xf32> to vector<16x1xf32>
    %38 = tpu.reciprocal %37 : vector<16x1xf32> -> vector<16x1xf32>
    %39 = vector.broadcast %38 : vector<16x1xf32> to vector<16x16xf32>
    %40 = arith.mulf %35, %39 : vector<16x16xf32>
    %cst_14 = arith.constant dense<0.000000e+00> : vector<16x8xf32>
    %41 = tpu.matmul %40, %28, %cst_14 {dimension_numbers = #tpu.dot_dimension_numbers<[1], [0], [0], [1], [0, 0, 1, 1], [], []>} : vector<16x16xf32>, vector<16x8xf32>, vector<16x8xf32> -> vector<16x8xf32>
    %42 = vector.extract_strided_slice %6 {offsets = [0, 16], sizes = [16, 8], strides = [1, 1]} : vector<16x32xf32> to vector<16x8xf32>
    %43 = vector.extract_strided_slice %7 {offsets = [0, 16], sizes = [16, 8], strides = [1, 1]} : vector<16x32xf32> to vector<16x8xf32>
    %44 = vector.extract_strided_slice %8 {offsets = [0, 16], sizes = [16, 8], strides = [1, 1]} : vector<16x32xf32> to vector<16x8xf32>
    %cst_15 = arith.constant dense<0.000000e+00> : vector<16x16xf32>
    %45 = tpu.matmul %42, %43, %cst_15 {dimension_numbers = #tpu.dot_dimension_numbers<[1], [1], [0], [0], [0, 0, 1, 0], [], []>} : vector<16x8xf32>, vector<16x8xf32>, vector<16x16xf32> -> vector<16x16xf32>
    %46 = arith.addf %45, %9 : vector<16x16xf32>
    %cst_16 = arith.constant dense<0xFF800000> : vector<16xf32>
    %47 = vector.multi_reduction <maximumf>, %46, %cst_16 [1] : vector<16x16xf32> to vector<16xf32>
    %48 = vector.shape_cast %47 : vector<16xf32> to vector<16x1xf32>
    %49 = vector.broadcast %48 : vector<16x1xf32> to vector<16x16xf32>
    %50 = arith.subf %46, %49 : vector<16x16xf32>
    %51 = math.exp %50 : vector<16x16xf32>
    %cst_17 = arith.constant dense<0.000000e+00> : vector<16xf32>
    %52 = vector.multi_reduction <add>, %51, %cst_17 [1] : vector<16x16xf32> to vector<16xf32>
    %53 = vector.shape_cast %52 : vector<16xf32> to vector<16x1xf32>
    %54 = tpu.reciprocal %53 : vector<16x1xf32> -> vector<16x1xf32>
    %55 = vector.broadcast %54 : vector<16x1xf32> to vector<16x16xf32>
    %56 = arith.mulf %51, %55 : vector<16x16xf32>
    %cst_18 = arith.constant dense<0.000000e+00> : vector<16x8xf32>
    %57 = tpu.matmul %56, %44, %cst_18 {dimension_numbers = #tpu.dot_dimension_numbers<[1], [0], [0], [1], [0, 0, 1, 1], [], []>} : vector<16x16xf32>, vector<16x8xf32>, vector<16x8xf32> -> vector<16x8xf32>
    %58 = vector.extract_strided_slice %6 {offsets = [0, 24], sizes = [16, 8], strides = [1, 1]} : vector<16x32xf32> to vector<16x8xf32>
    %59 = vector.extract_strided_slice %7 {offsets = [0, 24], sizes = [16, 8], strides = [1, 1]} : vector<16x32xf32> to vector<16x8xf32>
    %60 = vector.extract_strided_slice %8 {offsets = [0, 24], sizes = [16, 8], strides = [1, 1]} : vector<16x32xf32> to vector<16x8xf32>
    %cst_19 = arith.constant dense<0.000000e+00> : vector<16x16xf32>
    %61 = tpu.matmul %58, %59, %cst_19 {dimension_numbers = #tpu.dot_dimension_numbers<[1], [1], [0], [0], [0, 0, 1, 0], [], []>} : vector<16x8xf32>, vector<16x8xf32>, vector<16x16xf32> -> vector<16x16xf32>
    %62 = arith.addf %61, %9 : vector<16x16xf32>
    %cst_20 = arith.constant dense<0xFF800000> : vector<16xf32>
    %63 = vector.multi_reduction <maximumf>, %62, %cst_20 [1] : vector<16x16xf32> to vector<16xf32>
    %64 = vector.shape_cast %63 : vector<16xf32> to vector<16x1xf32>
    %65 = vector.broadcast %64 : vector<16x1xf32> to vector<16x16xf32>
    %66 = arith.subf %62, %65 : vector<16x16xf32>
    %67 = math.exp %66 : vector<16x16xf32>
    %cst_21 = arith.constant dense<0.000000e+00> : vector<16xf32>
    %68 = vector.multi_reduction <add>, %67, %cst_21 [1] : vector<16x16xf32> to vector<16xf32>
    %69 = vector.shape_cast %68 : vector<16xf32> to vector<16x1xf32>
    %70 = tpu.reciprocal %69 : vector<16x1xf32> -> vector<16x1xf32>
    %71 = vector.broadcast %70 : vector<16x1xf32> to vector<16x16xf32>
    %72 = arith.mulf %67, %71 : vector<16x16xf32>
    %cst_22 = arith.constant dense<0.000000e+00> : vector<16x8xf32>
    %73 = tpu.matmul %72, %60, %cst_22 {dimension_numbers = #tpu.dot_dimension_numbers<[1], [0], [0], [1], [0, 0, 1, 1], [], []>} : vector<16x16xf32>, vector<16x8xf32>, vector<16x8xf32> -> vector<16x8xf32>
    %74 = tpu.concatenate %25, %41, %57, %73 in 1 : vector<16x8xf32>, vector<16x8xf32>, vector<16x8xf32>, vector<16x8xf32> -> vector<16x32xf32>
    %c0_23 = arith.constant 0 : index
    %c128 = arith.constant 128 : index
    %75 = vector.load %arg1[%c0_23, %c128] : memref<32x512xf32, #tpu.memory_space<vmem>>, vector<32x32xf32>
    %c1 = arith.constant 1 : index
    %c0_24 = arith.constant 0 : index
    %76 = vector.load %arg2[%c1, %c0_24] : memref<8x128xf32, #tpu.memory_space<vmem>>, vector<1x32xf32>
    %cst_25 = arith.constant dense<0.000000e+00> : vector<16x32xf32>
    %77 = tpu.matmul %74, %75, %cst_25 {dimension_numbers = #tpu.dot_dimension_numbers<[1], [0], [0], [1], [0, 0, 1, 1], [], []>} : vector<16x32xf32>, vector<32x32xf32>, vector<16x32xf32> -> vector<16x32xf32>
    %78 = vector.broadcast %76 : vector<1x32xf32> to vector<16x32xf32>
    %79 = arith.addf %77, %78 : vector<16x32xf32>
    %c4 = arith.constant 4 : index
    %c0_26 = arith.constant 0 : index
    %80 = vector.load %arg2[%c4, %c0_26] : memref<8x128xf32, #tpu.memory_space<vmem>>, vector<1x32xf32>
    %c5 = arith.constant 5 : index
    %c0_27 = arith.constant 0 : index
    %81 = vector.load %arg2[%c5, %c0_27] : memref<8x128xf32, #tpu.memory_space<vmem>>, vector<1x32xf32>
    %82 = arith.addf %79, %0 : vector<16x32xf32>
    %cst_28 = arith.constant dense<0.000000e+00> : vector<16xf32>
    %83 = vector.multi_reduction <add>, %82, %cst_28 [1] : vector<16x32xf32> to vector<16xf32>
    %84 = vector.shape_cast %83 : vector<16xf32> to vector<16x1xf32>
    %cst_29 = arith.constant 3.200000e+01 : f32
    %85 = vector.broadcast %cst_29 : f32 to vector<16x1xf32>
    %86 = arith.divf %84, %85 : vector<16x1xf32>
    %87 = vector.broadcast %86 : vector<16x1xf32> to vector<16x32xf32>
    %88 = arith.subf %82, %87 : vector<16x32xf32>
    %89 = arith.mulf %88, %88 : vector<16x32xf32>
    %cst_30 = arith.constant dense<0.000000e+00> : vector<16xf32>
    %90 = vector.multi_reduction <add>, %89, %cst_30 [1] : vector<16x32xf32> to vector<16xf32>
    %91 = vector.shape_cast %90 : vector<16xf32> to vector<16x1xf32>
    %cst_31 = arith.constant 3.200000e+01 : f32
    %92 = vector.broadcast %cst_31 : f32 to vector<16x1xf32>
    %93 = arith.divf %91, %92 : vector<16x1xf32>
    %94 = vector.broadcast %86 : vector<16x1xf32> to vector<16x32xf32>
    %95 = arith.subf %82, %94 : vector<16x32xf32>
    %cst_32 = arith.constant 9.99999974E-6 : f32
    %96 = vector.broadcast %cst_32 : f32 to vector<16x1xf32>
    %97 = arith.addf %93, %96 : vector<16x1xf32>
    %98 = math.rsqrt %97 : vector<16x1xf32>
    %99 = vector.broadcast %98 : vector<16x1xf32> to vector<16x32xf32>
    %100 = arith.mulf %95, %99 : vector<16x32xf32>
    %101 = vector.broadcast %80 : vector<1x32xf32> to vector<16x32xf32>
    %102 = arith.mulf %100, %101 : vector<16x32xf32>
    %103 = vector.broadcast %81 : vector<1x32xf32> to vector<16x32xf32>
    %104 = arith.addf %102, %103 : vector<16x32xf32>
    %c0_33 = arith.constant 0 : index
    %c256 = arith.constant 256 : index
    %105 = vector.load %arg1[%c0_33, %c256] : memref<32x512xf32, #tpu.memory_space<vmem>>, vector<32x32xf32>
    %c2 = arith.constant 2 : index
    %c0_34 = arith.constant 0 : index
    %106 = vector.load %arg2[%c2, %c0_34] : memref<8x128xf32, #tpu.memory_space<vmem>>, vector<1x32xf32>
    %c0_35 = arith.constant 0 : index
    %c384 = arith.constant 384 : index
    %107 = vector.load %arg1[%c0_35, %c384] : memref<32x512xf32, #tpu.memory_space<vmem>>, vector<32x32xf32>
    %c3 = arith.constant 3 : index
    %c0_36 = arith.constant 0 : index
    %108 = vector.load %arg2[%c3, %c0_36] : memref<8x128xf32, #tpu.memory_space<vmem>>, vector<1x32xf32>
    %cst_37 = arith.constant dense<0.000000e+00> : vector<16x32xf32>
    %109 = tpu.matmul %104, %105, %cst_37 {dimension_numbers = #tpu.dot_dimension_numbers<[1], [0], [0], [1], [0, 0, 1, 1], [], []>} : vector<16x32xf32>, vector<32x32xf32>, vector<16x32xf32> -> vector<16x32xf32>
    %110 = vector.broadcast %106 : vector<1x32xf32> to vector<16x32xf32>
    %111 = arith.addf %109, %110 : vector<16x32xf32>
    %cst_38 = arith.constant 0.000000e+00 : f32
    %112 = vector.broadcast %cst_38 : f32 to vector<16x32xf32>
    %113 = arith.maximumf %111, %112 : vector<16x32xf32>
    %cst_39 = arith.constant dense<0.000000e+00> : vector<16x32xf32>
    %114 = tpu.matmul %113, %107, %cst_39 {dimension_numbers = #tpu.dot_dimension_numbers<[1], [0], [0], [1], [0, 0, 1, 1], [], []>} : vector<16x32xf32>, vector<32x32xf32>, vector<16x32xf32> -> vector<16x32xf32>
    %115 = vector.broadcast %108 : vector<1x32xf32> to vector<16x32xf32>
    %116 = arith.addf %114, %115 : vector<16x32xf32>
    %c6 = arith.constant 6 : index
    %c0_40 = arith.constant 0 : index
    %117 = vector.load %arg2[%c6, %c0_40] : memref<8x128xf32, #tpu.memory_space<vmem>>, vector<1x32xf32>
    %c7 = arith.constant 7 : index
    %c0_41 = arith.constant 0 : index
    %118 = vector.load %arg2[%c7, %c0_41] : memref<8x128xf32, #tpu.memory_space<vmem>>, vector<1x32xf32>
    %119 = arith.addf %104, %116 : vector<16x32xf32>
    %cst_42 = arith.constant dense<0.000000e+00> : vector<16xf32>
    %120 = vector.multi_reduction <add>, %119, %cst_42 [1] : vector<16x32xf32> to vector<16xf32>
    %121 = vector.shape_cast %120 : vector<16xf32> to vector<16x1xf32>
    %cst_43 = arith.constant 3.200000e+01 : f32
    %122 = vector.broadcast %cst_43 : f32 to vector<16x1xf32>
    %123 = arith.divf %121, %122 : vector<16x1xf32>
    %124 = vector.broadcast %123 : vector<16x1xf32> to vector<16x32xf32>
    %125 = arith.subf %119, %124 : vector<16x32xf32>
    %126 = arith.mulf %125, %125 : vector<16x32xf32>
    %cst_44 = arith.constant dense<0.000000e+00> : vector<16xf32>
    %127 = vector.multi_reduction <add>, %126, %cst_44 [1] : vector<16x32xf32> to vector<16xf32>
    %128 = vector.shape_cast %127 : vector<16xf32> to vector<16x1xf32>
    %cst_45 = arith.constant 3.200000e+01 : f32
    %129 = vector.broadcast %cst_45 : f32 to vector<16x1xf32>
    %130 = arith.divf %128, %129 : vector<16x1xf32>
    %131 = vector.broadcast %123 : vector<16x1xf32> to vector<16x32xf32>
    %132 = arith.subf %119, %131 : vector<16x32xf32>
    %cst_46 = arith.constant 9.99999974E-6 : f32
    %133 = vector.broadcast %cst_46 : f32 to vector<16x1xf32>
    %134 = arith.addf %130, %133 : vector<16x1xf32>
    %135 = math.rsqrt %134 : vector<16x1xf32>
    %136 = vector.broadcast %135 : vector<16x1xf32> to vector<16x32xf32>
    %137 = arith.mulf %132, %136 : vector<16x32xf32>
    %138 = vector.broadcast %117 : vector<1x32xf32> to vector<16x32xf32>
    %139 = arith.mulf %137, %138 : vector<16x32xf32>
    %140 = vector.broadcast %118 : vector<1x32xf32> to vector<16x32xf32>
    %141 = arith.addf %139, %140 : vector<16x32xf32>
    %c0_47 = arith.constant 0 : index
    %c0_48 = arith.constant 0 : index
    %142 = vector.load %arg4[%c0_47, %c0_48] : memref<16x32xf32, #tpu.memory_space<vmem>>, vector<16x32xf32>
    tpu.vector_store %arg4[%c0_47, %c0_48], %141 {strides = array<i32>} : memref<16x32xf32, #tpu.memory_space<vmem>>, vector<16x32xf32>,
    return
  }
}

</mosaic_0001>

<llo_original>
// kernel: mha_forward.1
$region0: #{mha_forward.1}
  #allocation0 [shape = 'u32[]', space=smem, size = 0x4, offset = 0x4, fixed_abs, tag = 'smem constant byte address 0x4 - core index']
  #allocation1 [shape = 'u32[72,128]{1,0:T(1,128)}', space=vmem, size = 0x9000, scoped, tag = 'internal scratch']
  %s0 = inlined_call_operand.hbm [shape: f32[16,32], index: 0, kind: input, shape index: {}]
  %s1 = inlined_call_operand.hbm [shape: f32[32,512], index: 1, kind: input, shape index: {}]
  %s2 = inlined_call_operand.hbm [shape: f32[8,128], index: 2, kind: input, shape index: {}]
  %s3 = inlined_call_operand.hbm [shape: f32[16,16], index: 3, kind: input, shape index: {}]
  %s4 = inlined_call_operand.hbm [shape: f32[16,32], index: 4, kind: output, shape index: {}]
  %s5 = sld [smem:[#allocation0]]
  $region42: #{mha_forward.1} parent=0
    _
  %s7 = ssub.s32 1, %s5
  %s8 = scalar_select 0, %s7, %s5
  $region1: #{mha_forward.1} parent=0
    #allocation2 [shape = 'u8[8192]{0}', space=vmem, size = 0x2000, scoped, tag = 'input window, operand 0, single buffered']
    #allocation3 [shape = 's32[1]{0}', space=sflag, size = 0x4, scoped, tag = 'scoped memory for mha_forward.1']
    #allocation4 [shape = 's32[1]{0}', space=sflag, size = 0x4, scoped, tag = 'scoped memory for mha_forward.1']
    #allocation5 [shape = 'u8[65536]{0}', space=vmem, size = 0x10000, scoped, tag = 'input window, operand 1, single buffered']
    #allocation6 [shape = 's32[1]{0}', space=sflag, size = 0x4, scoped, tag = 'scoped memory for mha_forward.1']
    #allocation7 [shape = 'u8[4096]{0}', space=vmem, size = 0x1000, scoped, tag = 'input window, operand 2, single buffered']
    #allocation8 [shape = 'u8[8192]{0}', space=vmem, size = 0x2000, scoped, tag = 'input window, operand 3, single buffered']
    #allocation9 [shape = 's32[1]{0}', space=sflag, size = 0x4, scoped, tag = 'scoped memory for mha_forward.1']
    #allocation10 [shape = 'u8[8192]{0}', space=vmem, size = 0x2000, scoped, tag = 'output window, operand 0, single buffered']
    %9 = vsyncpa [#allocation3], 0
    %10 = vsyncpa [#allocation6], 0
    %11 = vsyncpa [#allocation9], 0
    %12 = vsyncpa [#allocation4], 0
    // Predicated region
    $region2: #{mha_forward.1} parent=1 // pred_check
      _
    $region3: #{mha_forward.1} parent=1 // pred_check_branch
      %14 = sbr.rel (0) target = $region5
    $region4: #{mha_forward.1} parent=1 // pred_region
      %16 = vsyncadd [#allocation3], 0
      %s17 = sshll.u32 %s0, 4
      %s18 = int_to_ptr.hbm [resolvable:$true] %s17
      %s19 = sshll.u32 [#allocation2], 4
      %s20 = int_to_ptr.vmem [resolvable:$true] %s19
      %25 = dma.hbm_to_vmem [thread:$0]  %s18, 256, %s20, [#allocation3], 128, 128, 8
    $region5: #{mha_forward.1} parent=1 // pred_fallthru
      _
    // Predicated region
    $region6: #{mha_forward.1} parent=1 // pred_check
      _
    $region7: #{mha_forward.1} parent=1 // pred_check_branch
      %27 = sbr.rel (0) target = $region9
    $region8: #{mha_forward.1} parent=1 // pred_region
      %29 = vsyncadd [#allocation6], 0
      %s30 = sshll.u32 %s1, 4
      %s31 = int_to_ptr.hbm [resolvable:$true] %s30
      %s32 = sshll.u32 [#allocation5], 4
      %s33 = int_to_ptr.vmem [resolvable:$true] %s32
      %38 = dma.hbm_to_vmem [thread:$0]  %s31, 2048, %s33, [#allocation6], 512, 512, 32
    $region9: #{mha_forward.1} parent=1 // pred_fallthru
      _
    // Predicated region
    $region10: #{mha_forward.1} parent=1 // pred_check
      _
    $region11: #{mha_forward.1} parent=1 // pred_check_branch
      %40 = sbr.rel (0) target = $region13
    $region12: #{mha_forward.1} parent=1 // pred_region
      %42 = vsyncadd [#allocation6], 0
      %s44 = sshll.u32 %s2, 4
      %s45 = int_to_ptr.hbm [resolvable:$true] %s44
      %s46 = sshll.u32 [#allocation7], 4
      %s47 = int_to_ptr.vmem [resolvable:$true] %s46
      %49 = dma.hbm_to_vmem [thread:$0]  %s45, 128, %s47, [#allocation6]
    $region13: #{mha_forward.1} parent=1 // pred_fallthru
      _
    // Predicated region
    $region14: #{mha_forward.1} parent=1 // pred_check
      _
    $region15: #{mha_forward.1} parent=1 // pred_check_branch
      %51 = sbr.rel (0) target = $region17
    $region16: #{mha_forward.1} parent=1 // pred_region
      %53 = vsyncadd [#allocation9], 0
      %s54 = sshll.u32 %s3, 4
      %s55 = int_to_ptr.hbm [resolvable:$true] %s54
      %s56 = sshll.u32 [#allocation8], 4
      %s57 = int_to_ptr.vmem [resolvable:$true] %s56
      %62 = dma.hbm_to_vmem [thread:$0]  %s55, 256, %s57, [#allocation9], 128, 128, 8
    $region17: #{mha_forward.1} parent=1 // pred_fallthru
      _
    // Predicated region
    $region18: #{mha_forward.1} parent=1 // pred_check
      _
    $region19: #{mha_forward.1} parent=1 // pred_check_branch
      %64 = sbr.rel (0) target = $region21
    $region20: #{mha_forward.1} parent=1 // pred_region
      %66 = dma.done [#allocation3], 256
    $region21: #{mha_forward.1} parent=1 // pred_fallthru
      _
    // Predicated region
    $region22: #{mha_forward.1} parent=1 // pred_check
      _
    $region23: #{mha_forward.1} parent=1 // pred_check_branch
      %68 = sbr.rel (0) target = $region25
    $region24: #{mha_forward.1} parent=1 // pred_region
      %70 = dma.done [#allocation6], 2048
    $region25: #{mha_forward.1} parent=1 // pred_fallthru
      _
    // Predicated region
    $region26: #{mha_forward.1} parent=1 // pred_check
      _
    $region27: #{mha_forward.1} parent=1 // pred_check_branch
      %72 = sbr.rel (0) target = $region29
    $region28: #{mha_forward.1} parent=1 // pred_region
      %74 = dma.done [#allocation6], 128
    $region29: #{mha_forward.1} parent=1 // pred_fallthru
      _
    // Predicated region
    $region30: #{mha_forward.1} parent=1 // pred_check
      _
    $region31: #{mha_forward.1} parent=1 // pred_check_branch
      %76 = sbr.rel (0) target = $region33
    $region32: #{mha_forward.1} parent=1 // pred_region
      %78 = dma.done [#allocation9], 256
    $region33: #{mha_forward.1} parent=1 // pred_fallthru
      _
    %v79 = vld [vmem:[#allocation2] sm:$0xff]
    %v80 = vld [vmem:[#allocation2 + $0x8] sm:$0xff]
    %v81 = vld [vmem:[#allocation5] sm:$0xff]
    %v82 = vld [vmem:[#allocation5 + $0x20] sm:$0xff]
    %v83 = vld [vmem:[#allocation5 + $0x40] sm:$0xff]
    %v84 = vld [vmem:[#allocation5 + $0x60] sm:$0xff]
    %v85 = vld [vmem:[#allocation7] sm:$0x1]
    %v86 = vperm.slane %v85, 0
    %vm87 = vcmask 261120
    %v89 = vsel %vm87, %v79, 0
    %v92 = vsel %vm87, %v80, 0
    %94 = vmatpush.msra.mxu0 0.0
    %95 = vmatpush.msra.mxu0 0.0
    %96 = vmatpush.msra.mxu0 0.0
    %97 = vmatpush.msra.mxu0 0.0
    %98 = vmatpush.msra.mxu0 0.0
    %99 = vmatpush.msra.mxu0 0.0
    %100 = vmatpush.msra.mxu0 0.0
    %101 = vmatpush.msra.mxu0 0.0
    %102 = vmatpush.msra.mxu0 0.0
    %103 = vmatpush.msra.mxu0 0.0
    %104 = vmatpush.msra.mxu0 0.0
    %105 = vmatpush.msra.mxu0 0.0
    %106 = vmatpush.msra.mxu0 %v84
    %107 = vmatpush.msra.mxu0 %v83
    %108 = vmatpush.msra.mxu0 %v82
    %109 = vmatpush.msra.mxu0 %v81
    %110 = vmatmul.f32.gmra.mxu0 %v89
    %v111 = vpop.f32.mrf.mxu0
    %v112 = vadd.f32 %v86, %v111
    %113 = vmatmul.f32.gmra.mxu0 %v92
    %v114 = vpop.f32.mrf.mxu0
    %v115 = vadd.f32 %v86, %v114
    %116 = vdwg.mxu0
    %v117 = vld [vmem:[#allocation8] sm:$0xff]
    %v118 = vld [vmem:[#allocation8 + $0x8] sm:$0xff]
    %121 = vrot.lane.b32.xlu0 %v112, 96
    %v122 = vpop.permute.xlu0 %121
    %123 = vrot.lane.b32.xlu0 %v115, 96
    %v124 = vpop.permute.xlu0 %123
    %vm125 = vcmask 64512
    %v126 = vsel %vm125, %v112, 0
    %v128 = vsel %vm125, %v115, 0
    %v130 = vsel %vm125, %v122, 0
    %v132 = vsel %vm125, %v124, 0
    %134 = vmatpush.xpose.msra.mxu0 0.0
    %135 = vmatpush.xpose.msra.mxu0 0.0
    %136 = vmatpush.xpose.msra.mxu0 0.0
    %137 = vmatpush.xpose.msra.mxu0 0.0
    %138 = vmatpush.xpose.msra.mxu0 0.0
    %139 = vmatpush.xpose.msra.mxu0 0.0
    %140 = vmatpush.xpose.msra.mxu0 0.0
    %141 = vmatpush.xpose.msra.mxu0 0.0
    %142 = vmatpush.xpose.msra.mxu0 0.0
    %143 = vmatpush.xpose.msra.mxu0 0.0
    %144 = vmatpush.xpose.msra.mxu0 0.0
    %145 = vmatpush.xpose.msra.mxu0 0.0
    %146 = vmatpush.xpose.msra.mxu0 0.0
    %147 = vmatpush.xpose.msra.mxu0 0.0
    %148 = vmatpush.xpose.msra.mxu0 %v132
    %149 = vmatpush.xpose.msra.mxu0 %v130
    %150 = vmatmul.f32.gmra.mxu0 %v126
    %v151 = vpop.f32.mrf.mxu0
    %v152 = vadd.f32 %v117, %v151
    %153 = vmatmul.f32.gmra.mxu0 %v128
    %v154 = vpop.f32.mrf.mxu0
    %v155 = vadd.f32 %v118, %v154
    %156 = vdwg.mxu0
    %vm157 = vcmask 130048
    %v158 = vsel %vm157, %v152, -inf
    %159 = vmax.xlane.f32.xlu0 %v158
    %v160 = vpop.xlane.xlu0 %159
    %v161 = vsel %vm157, %v155, -inf
    %162 = vmax.xlane.f32.xlu0 %v161
    %v163 = vpop.xlane.xlu0 %162
    %v164 = vsub.f32 %v152, %v160
    %v165 = vsub.f32 %v155, %v163
    %v166 = vmul.f32 %v164, 1.442695
    %v167 = vpow.pop %v166
    %v168 = vmul.f32 %v165, 1.442695
    %v169 = vpow.pop %v168
    %v170 = vsel %vm157, %v167, 0.0
    %171 = vadd.xlane.f32.xlu0 %v170
    %v172 = vpop.xlane.xlu0 %171
    %v173 = vsel %vm157, %v169, 0.0
    %174 = vadd.xlane.f32.xlu0 %v173
    %v175 = vpop.xlane.xlu0 %174
    %v176 = vrcp.pop %v172
    %v177 = vmul.f32 %v172, %v176
    %v178 = vsub.f32 1.0, %v177
    %v179 = vmul.f32 %v176, %v178
    %v180 = vadd.f32 %v176, %v179
    %vm181 = vweird.f32 %v172
    %vm182 = vweird.f32 %v176
    %vm183 = vmor %vm181, %vm182
    %v184 = vsel %vm183, %v176, %v180
    %v185 = vand.u32 2147483647, %v172
    %vm186 = vcmp.eq.f32.partialorder %v185, 8.507059e+37
    %v187 = vand.u32 %v172, 2147483648
    %v188 = vor.u32 1.1754944e-38, %v187
    %v189 = vsel %vm186, %v188, %v184
    %v190 = vrcp.pop %v175
    %v191 = vmul.f32 %v175, %v190
    %v192 = vsub.f32 1.0, %v191
    %v193 = vmul.f32 %v190, %v192
    %v194 = vadd.f32 %v190, %v193
    %vm195 = vweird.f32 %v175
    %vm196 = vweird.f32 %v190
    %vm197 = vmor %vm195, %vm196
    %v198 = vsel %vm197, %v190, %v194
    %v199 = vand.u32 2147483647, %v175
    %vm200 = vcmp.eq.f32.partialorder %v199, 8.507059e+37
    %v201 = vand.u32 %v175, 2147483648
    %v202 = vor.u32 1.1754944e-38, %v201
    %v203 = vsel %vm200, %v202, %v198
    %v204 = vmul.f32 %v167, %v189
    %v205 = vmul.f32 %v169, %v203
    %206 = vrot.lane.b32.xlu0 %v112, 64
    %v207 = vpop.permute.xlu0 %206
    %208 = vrot.lane.b32.xlu0 %v115, 64
    %v209 = vpop.permute.xlu0 %208
    %v213 = vsel %vm157, %v204, 0
    %v216 = vsel %vm157, %v205, 0
    %218 = vmatpush.msra.mxu0 0.0
    %219 = vmatpush.msra.mxu0 0.0
    %220 = vmatpush.msra.mxu0 0.0
    %221 = vmatpush.msra.mxu0 0.0
    %222 = vmatpush.msra.mxu0 0.0
    %223 = vmatpush.msra.mxu0 0.0
    %224 = vmatpush.msra.mxu0 0.0
    %225 = vmatpush.msra.mxu0 0.0
    %226 = vmatpush.msra.mxu0 0.0
    %227 = vmatpush.msra.mxu0 0.0
    %228 = vmatpush.msra.mxu0 0.0
    %229 = vmatpush.msra.mxu0 0.0
    %230 = vmatpush.msra.mxu0 0.0
    %231 = vmatpush.msra.mxu0 0.0
    %232 = vmatpush.msra.mxu0 %v209
    %233 = vmatpush.msra.mxu0 %v207
    %234 = vmatmul.f32.gmra.mxu0 %v213
    %v235 = vpop.f32.mrf.mxu0
    %v236 = vadd.f32 0.0, %v235
    %237 = vmatmul.f32.gmra.mxu0 %v216
    %v238 = vpop.f32.mrf.mxu0
    %v239 = vadd.f32 0.0, %v238
    %240 = vdwg.mxu0
    %241 = vrot.lane.b32.xlu0 %v112, 120
    %v242 = vpop.permute.xlu0 %241
    %243 = vrot.lane.b32.xlu0 %v115, 120
    %v244 = vpop.permute.xlu0 %243
    %245 = vrot.lane.b32.xlu0 %v112, 88
    %v246 = vpop.permute.xlu0 %245
    %247 = vrot.lane.b32.xlu0 %v115, 88
    %v248 = vpop.permute.xlu0 %247
    %v249 = vsel %vm125, %v242, 0
    %v251 = vsel %vm125, %v244, 0
    %v253 = vsel %vm125, %v246, 0
    %v255 = vsel %vm125, %v248, 0
    %257 = vmatpush.xpose.msra.mxu0 0.0
    %258 = vmatpush.xpose.msra.mxu0 0.0
    %259 = vmatpush.xpose.msra.mxu0 0.0
    %260 = vmatpush.xpose.msra.mxu0 0.0
    %261 = vmatpush.xpose.msra.mxu0 0.0
    %262 = vmatpush.xpose.msra.mxu0 0.0
    %263 = vmatpush.xpose.msra.mxu0 0.0
    %264 = vmatpush.xpose.msra.mxu0 0.0
    %265 = vmatpush.xpose.msra.mxu0 0.0
    %266 = vmatpush.xpose.msra.mxu0 0.0
    %267 = vmatpush.xpose.msra.mxu0 0.0
    %268 = vmatpush.xpose.msra.mxu0 0.0
    %269 = vmatpush.xpose.msra.mxu0 0.0
    %270 = vmatpush.xpose.msra.mxu0 0.0
    %271 = vmatpush.xpose.msra.mxu0 %v255
    %272 = vmatpush.xpose.msra.mxu0 %v253
    %273 = vmatmul.f32.gmra.mxu0 %v249
    %v274 = vpop.f32.mrf.mxu0
    %v275 = vadd.f32 %v117, %v274
    %276 = vmatmul.f32.gmra.mxu0 %v251
    %v277 = vpop.f32.mrf.mxu0
    %v278 = vadd.f32 %v118, %v277
    %279 = vdwg.mxu0
    %v280 = vsel %vm157, %v275, -inf
    %281 = vmax.xlane.f32.xlu0 %v280
    %v282 = vpop.xlane.xlu0 %281
    %v283 = vsel %vm157, %v278, -inf
    %284 = vmax.xlane.f32.xlu0 %v283
    %v285 = vpop.xlane.xlu0 %284
    %v286 = vsub.f32 %v275, %v282
    %v287 = vsub.f32 %v278, %v285
    %v288 = vmul.f32 %v286, 1.442695
    %v289 = vpow.pop %v288
    %v290 = vmul.f32 %v287, 1.442695
    %v291 = vpow.pop %v290
    %v292 = vsel %vm157, %v289, 0.0
    %293 = vadd.xlane.f32.xlu0 %v292
    %v294 = vpop.xlane.xlu0 %293
    %v295 = vsel %vm157, %v291, 0.0
    %296 = vadd.xlane.f32.xlu0 %v295
    %v297 = vpop.xlane.xlu0 %296
    %v298 = vrcp.pop %v294
    %v299 = vmul.f32 %v294, %v298
    %v300 = vsub.f32 1.0, %v299
    %v301 = vmul.f32 %v298, %v300
    %v302 = vadd.f32 %v298, %v301
    %vm303 = vweird.f32 %v294
    %vm304 = vweird.f32 %v298
    %vm305 = vmor %vm303, %vm304
    %v306 = vsel %vm305, %v298, %v302
    %v307 = vand.u32 2147483647, %v294
    %vm308 = vcmp.eq.f32.partialorder %v307, 8.507059e+37
    %v309 = vand.u32 %v294, 2147483648
    %v310 = vor.u32 1.1754944e-38, %v309
    %v311 = vsel %vm308, %v310, %v306
    %v312 = vrcp.pop %v297
    %v313 = vmul.f32 %v297, %v312
    %v314 = vsub.f32 1.0, %v313
    %v315 = vmul.f32 %v312, %v314
    %v316 = vadd.f32 %v312, %v315
    %vm317 = vweird.f32 %v297
    %vm318 = vweird.f32 %v312
    %vm319 = vmor %vm317, %vm318
    %v320 = vsel %vm319, %v312, %v316
    %v321 = vand.u32 2147483647, %v297
    %vm322 = vcmp.eq.f32.partialorder %v321, 8.507059e+37
    %v323 = vand.u32 %v297, 2147483648
    %v324 = vor.u32 1.1754944e-38, %v323
    %v325 = vsel %vm322, %v324, %v320
    %v326 = vmul.f32 %v289, %v311
    %v327 = vmul.f32 %v291, %v325
    %328 = vrot.lane.b32.xlu0 %v112, 56
    %v329 = vpop.permute.xlu0 %328
    %330 = vrot.lane.b32.xlu0 %v115, 56
    %v331 = vpop.permute.xlu0 %330
    %v335 = vsel %vm157, %v326, 0
    %v338 = vsel %vm157, %v327, 0
    %340 = vmatpush.msra.mxu0 0.0
    %341 = vmatpush.msra.mxu0 0.0
    %342 = vmatpush.msra.mxu0 0.0
    %343 = vmatpush.msra.mxu0 0.0
    %344 = vmatpush.msra.mxu0 0.0
    %345 = vmatpush.msra.mxu0 0.0
    %346 = vmatpush.msra.mxu0 0.0
    %347 = vmatpush.msra.mxu0 0.0
    %348 = vmatpush.msra.mxu0 0.0
    %349 = vmatpush.msra.mxu0 0.0
    %350 = vmatpush.msra.mxu0 0.0
    %351 = vmatpush.msra.mxu0 0.0
    %352 = vmatpush.msra.mxu0 0.0
    %353 = vmatpush.msra.mxu0 0.0
    %354 = vmatpush.msra.mxu0 %v331
    %355 = vmatpush.msra.mxu0 %v329
    %356 = vmatmul.f32.gmra.mxu0 %v335
    %v357 = vpop.f32.mrf.mxu0
    %v358 = vadd.f32 0.0, %v357
    %359 = vmatmul.f32.gmra.mxu0 %v338
    %v360 = vpop.f32.mrf.mxu0
    %v361 = vadd.f32 0.0, %v360
    %362 = vdwg.mxu0
    %363 = vrot.lane.b32.xlu0 %v112, 112
    %v364 = vpop.permute.xlu0 %363
    %365 = vrot.lane.b32.xlu0 %v115, 112
    %v366 = vpop.permute.xlu0 %365
    %367 = vrot.lane.b32.xlu0 %v112, 80
    %v368 = vpop.permute.xlu0 %367
    %369 = vrot.lane.b32.xlu0 %v115, 80
    %v370 = vpop.permute.xlu0 %369
    %v371 = vsel %vm125, %v364, 0
    %v373 = vsel %vm125, %v366, 0
    %v375 = vsel %vm125, %v368, 0
    %v377 = vsel %vm125, %v370, 0
    %379 = vmatpush.xpose.msra.mxu0 0.0
    %380 = vmatpush.xpose.msra.mxu0 0.0
    %381 = vmatpush.xpose.msra.mxu0 0.0
    %382 = vmatpush.xpose.msra.mxu0 0.0
    %383 = vmatpush.xpose.msra.mxu0 0.0
    %384 = vmatpush.xpose.msra.mxu0 0.0
    %385 = vmatpush.xpose.msra.mxu0 0.0
    %386 = vmatpush.xpose.msra.mxu0 0.0
    %387 = vmatpush.xpose.msra.mxu0 0.0
    %388 = vmatpush.xpose.msra.mxu0 0.0
    %389 = vmatpush.xpose.msra.mxu0 0.0
    %390 = vmatpush.xpose.msra.mxu0 0.0
    %391 = vmatpush.xpose.msra.mxu0 0.0
    %392 = vmatpush.xpose.msra.mxu0 0.0
    %393 = vmatpush.xpose.msra.mxu0 %v377
    %394 = vmatpush.xpose.msra.mxu0 %v375
    %395 = vmatmul.f32.gmra.mxu0 %v371
    %v396 = vpop.f32.mrf.mxu0
    %v397 = vadd.f32 %v117, %v396
    %398 = vmatmul.f32.gmra.mxu0 %v373
    %v399 = vpop.f32.mrf.mxu0
    %v400 = vadd.f32 %v118, %v399
    %401 = vdwg.mxu0
    %v402 = vsel %vm157, %v397, -inf
    %403 = vmax.xlane.f32.xlu0 %v402
    %v404 = vpop.xlane.xlu0 %403
    %v405 = vsel %vm157, %v400, -inf
    %406 = vmax.xlane.f32.xlu0 %v405
    %v407 = vpop.xlane.xlu0 %406
    %v408 = vsub.f32 %v397, %v404
    %v409 = vsub.f32 %v400, %v407
    %v410 = vmul.f32 %v408, 1.442695
    %v411 = vpow.pop %v410
    %v412 = vmul.f32 %v409, 1.442695
    %v413 = vpow.pop %v412
    %v414 = vsel %vm157, %v411, 0.0
    %415 = vadd.xlane.f32.xlu0 %v414
    %v416 = vpop.xlane.xlu0 %415
    %v417 = vsel %vm157, %v413, 0.0
    %418 = vadd.xlane.f32.xlu0 %v417
    %v419 = vpop.xlane.xlu0 %418
    %v420 = vrcp.pop %v416
    %v421 = vmul.f32 %v416, %v420
    %v422 = vsub.f32 1.0, %v421
    %v423 = vmul.f32 %v420, %v422
    %v424 = vadd.f32 %v420, %v423
    %vm425 = vweird.f32 %v416
    %vm426 = vweird.f32 %v420
    %vm427 = vmor %vm425, %vm426
    %v428 = vsel %vm427, %v420, %v424
    %v429 = vand.u32 2147483647, %v416
    %vm430 = vcmp.eq.f32.partialorder %v429, 8.507059e+37
    %v431 = vand.u32 %v416, 2147483648
    %v432 = vor.u32 1.1754944e-38, %v431
    %v433 = vsel %vm430, %v432, %v428
    %v434 = vrcp.pop %v419
    %v435 = vmul.f32 %v419, %v434
    %v436 = vsub.f32 1.0, %v435
    %v437 = vmul.f32 %v434, %v436
    %v438 = vadd.f32 %v434, %v437
    %vm439 = vweird.f32 %v419
    %vm440 = vweird.f32 %v434
    %vm441 = vmor %vm439, %vm440
    %v442 = vsel %vm441, %v434, %v438
    %v443 = vand.u32 2147483647, %v419
    %vm444 = vcmp.eq.f32.partialorder %v443, 8.507059e+37
    %v445 = vand.u32 %v419, 2147483648
    %v446 = vor.u32 1.1754944e-38, %v445
    %v447 = vsel %vm444, %v446, %v442
    %v448 = vmul.f32 %v411, %v433
    %v449 = vmul.f32 %v413, %v447
    %450 = vrot.lane.b32.xlu0 %v112, 48
    %v451 = vpop.permute.xlu0 %450
    %452 = vrot.lane.b32.xlu0 %v115, 48
    %v453 = vpop.permute.xlu0 %452
    %v457 = vsel %vm157, %v448, 0
    %v460 = vsel %vm157, %v449, 0
    %462 = vmatpush.msra.mxu0 0.0
    %463 = vmatpush.msra.mxu0 0.0
    %464 = vmatpush.msra.mxu0 0.0
    %465 = vmatpush.msra.mxu0 0.0
    %466 = vmatpush.msra.mxu0 0.0
    %467 = vmatpush.msra.mxu0 0.0
    %468 = vmatpush.msra.mxu0 0.0
    %469 = vmatpush.msra.mxu0 0.0
    %470 = vmatpush.msra.mxu0 0.0
    %471 = vmatpush.msra.mxu0 0.0
    %472 = vmatpush.msra.mxu0 0.0
    %473 = vmatpush.msra.mxu0 0.0
    %474 = vmatpush.msra.mxu0 0.0
    %475 = vmatpush.msra.mxu0 0.0
    %476 = vmatpush.msra.mxu0 %v453
    %477 = vmatpush.msra.mxu0 %v451
    %478 = vmatmul.f32.gmra.mxu0 %v457
    %v479 = vpop.f32.mrf.mxu0
    %v480 = vadd.f32 0.0, %v479
    %481 = vmatmul.f32.gmra.mxu0 %v460
    %v482 = vpop.f32.mrf.mxu0
    %v483 = vadd.f32 0.0, %v482
    %484 = vdwg.mxu0
    %485 = vrot.lane.b32.xlu0 %v112, 104
    %v486 = vpop.permute.xlu0 %485
    %487 = vrot.lane.b32.xlu0 %v115, 104
    %v488 = vpop.permute.xlu0 %487
    %489 = vrot.lane.b32.xlu0 %v112, 72
    %v490 = vpop.permute.xlu0 %489
    %491 = vrot.lane.b32.xlu0 %v115, 72
    %v492 = vpop.permute.xlu0 %491
    %v493 = vsel %vm125, %v486, 0
    %v495 = vsel %vm125, %v488, 0
    %v497 = vsel %vm125, %v490, 0
    %v499 = vsel %vm125, %v492, 0
    %501 = vmatpush.xpose.msra.mxu0 0.0
    %502 = vmatpush.xpose.msra.mxu0 0.0
    %503 = vmatpush.xpose.msra.mxu0 0.0
    %504 = vmatpush.xpose.msra.mxu0 0.0
    %505 = vmatpush.xpose.msra.mxu0 0.0
    %506 = vmatpush.xpose.msra.mxu0 0.0
    %507 = vmatpush.xpose.msra.mxu0 0.0
    %508 = vmatpush.xpose.msra.mxu0 0.0
    %509 = vmatpush.xpose.msra.mxu0 0.0
    %510 = vmatpush.xpose.msra.mxu0 0.0
    %511 = vmatpush.xpose.msra.mxu0 0.0
    %512 = vmatpush.xpose.msra.mxu0 0.0
    %513 = vmatpush.xpose.msra.mxu0 0.0
    %514 = vmatpush.xpose.msra.mxu0 0.0
    %515 = vmatpush.xpose.msra.mxu0 %v499
    %516 = vmatpush.xpose.msra.mxu0 %v497
    %517 = vmatmul.f32.gmra.mxu0 %v493
    %v518 = vpop.f32.mrf.mxu0
    %v519 = vadd.f32 %v117, %v518
    %520 = vmatmul.f32.gmra.mxu0 %v495
    %v521 = vpop.f32.mrf.mxu0
    %v522 = vadd.f32 %v118, %v521
    %523 = vdwg.mxu0
    %v524 = vsel %vm157, %v519, -inf
    %525 = vmax.xlane.f32.xlu0 %v524
    %v526 = vpop.xlane.xlu0 %525
    %v527 = vsel %vm157, %v522, -inf
    %528 = vmax.xlane.f32.xlu0 %v527
    %v529 = vpop.xlane.xlu0 %528
    %v530 = vsub.f32 %v519, %v526
    %v531 = vsub.f32 %v522, %v529
    %v532 = vmul.f32 %v530, 1.442695
    %v533 = vpow.pop %v532
    %v534 = vmul.f32 %v531, 1.442695
    %v535 = vpow.pop %v534
    %v536 = vsel %vm157, %v533, 0.0
    %537 = vadd.xlane.f32.xlu0 %v536
    %v538 = vpop.xlane.xlu0 %537
    %v539 = vsel %vm157, %v535, 0.0
    %540 = vadd.xlane.f32.xlu0 %v539
    %v541 = vpop.xlane.xlu0 %540
    %v542 = vrcp.pop %v538
    %v543 = vmul.f32 %v538, %v542
    %v544 = vsub.f32 1.0, %v543
    %v545 = vmul.f32 %v542, %v544
    %v546 = vadd.f32 %v542, %v545
    %vm547 = vweird.f32 %v538
    %vm548 = vweird.f32 %v542
    %vm549 = vmor %vm547, %vm548
    %v550 = vsel %vm549, %v542, %v546
    %v551 = vand.u32 2147483647, %v538
    %vm552 = vcmp.eq.f32.partialorder %v551, 8.507059e+37
    %v553 = vand.u32 %v538, 2147483648
    %v554 = vor.u32 1.1754944e-38, %v553
    %v555 = vsel %vm552, %v554, %v550
    %v556 = vrcp.pop %v541
    %v557 = vmul.f32 %v541, %v556
    %v558 = vsub.f32 1.0, %v557
    %v559 = vmul.f32 %v556, %v558
    %v560 = vadd.f32 %v556, %v559
    %vm561 = vweird.f32 %v541
    %vm562 = vweird.f32 %v556
    %vm563 = vmor %vm561, %vm562
    %v564 = vsel %vm563, %v556, %v560
    %v565 = vand.u32 2147483647, %v541
    %vm566 = vcmp.eq.f32.partialorder %v565, 8.507059e+37
    %v567 = vand.u32 %v541, 2147483648
    %v568 = vor.u32 1.1754944e-38, %v567
    %v569 = vsel %vm566, %v568, %v564
    %v570 = vmul.f32 %v533, %v555
    %v571 = vmul.f32 %v535, %v569
    %572 = vrot.lane.b32.xlu0 %v112, 40
    %v573 = vpop.permute.xlu0 %572
    %574 = vrot.lane.b32.xlu0 %v115, 40
    %v575 = vpop.permute.xlu0 %574
    %v579 = vsel %vm157, %v570, 0
    %v582 = vsel %vm157, %v571, 0
    %584 = vmatpush.msra.mxu0 0.0
    %585 = vmatpush.msra.mxu0 0.0
    %586 = vmatpush.msra.mxu0 0.0
    %587 = vmatpush.msra.mxu0 0.0
    %588 = vmatpush.msra.mxu0 0.0
    %589 = vmatpush.msra.mxu0 0.0
    %590 = vmatpush.msra.mxu0 0.0
    %591 = vmatpush.msra.mxu0 0.0
    %592 = vmatpush.msra.mxu0 0.0
    %593 = vmatpush.msra.mxu0 0.0
    %594 = vmatpush.msra.mxu0 0.0
    %595 = vmatpush.msra.mxu0 0.0
    %596 = vmatpush.msra.mxu0 0.0
    %597 = vmatpush.msra.mxu0 0.0
    %598 = vmatpush.msra.mxu0 %v575
    %599 = vmatpush.msra.mxu0 %v573
    %600 = vmatmul.f32.gmra.mxu0 %v579
    %v601 = vpop.f32.mrf.mxu0
    %v602 = vadd.f32 0.0, %v601
    %603 = vmatmul.f32.gmra.mxu0 %v582
    %v604 = vpop.f32.mrf.mxu0
    %v605 = vadd.f32 0.0, %v604
    %606 = vdwg.mxu0
    %609 = vrot.lane.b32.xlu0 %v358, 8
    %v610 = vpop.permute.xlu0 %609
    %611 = vrot.lane.b32.xlu0 %v361, 8
    %v612 = vpop.permute.xlu0 %611
    %617 = vrot.lane.b32.xlu0 %v480, 16
    %v618 = vpop.permute.xlu0 %617
    %619 = vrot.lane.b32.xlu0 %v483, 16
    %v620 = vpop.permute.xlu0 %619
    %625 = vrot.lane.b32.xlu0 %v602, 24
    %v626 = vpop.permute.xlu0 %625
    %627 = vrot.lane.b32.xlu0 %v605, 24
    %v628 = vpop.permute.xlu0 %627
    %v631 = vsel %vm125, %v236, %v610
    %v632 = vsel %vm125, %v239, %v612
    %v633 = vsel %vm157, %v631, %v618
    %v634 = vsel %vm157, %v632, %v620
    %vm635 = vcmask 195584
    %v636 = vsel %vm635, %v633, %v626
    %v637 = vsel %vm635, %v634, %v628
    %v638 = vld [vmem:[#allocation5 + $0x8] sm:$0xff]
    %v639 = vld [vmem:[#allocation5 + $0x28] sm:$0xff]
    %v640 = vld [vmem:[#allocation5 + $0x48] sm:$0xff]
    %v641 = vld [vmem:[#allocation5 + $0x68] sm:$0xff]
    %v642 = vld [vmem:[#allocation7 + $0x1] sm:$0x1]
    %v643 = vperm.slane %v642, 0
    %v645 = vsel %vm87, %v636, 0
    %v648 = vsel %vm87, %v637, 0
    %650 = vmatpush.msra.mxu0 0.0
    %651 = vmatpush.msra.mxu0 0.0
    %652 = vmatpush.msra.mxu0 0.0
    %653 = vmatpush.msra.mxu0 0.0
    %654 = vmatpush.msra.mxu0 0.0
    %655 = vmatpush.msra.mxu0 0.0
    %656 = vmatpush.msra.mxu0 0.0
    %657 = vmatpush.msra.mxu0 0.0
    %658 = vmatpush.msra.mxu0 0.0
    %659 = vmatpush.msra.mxu0 0.0
    %660 = vmatpush.msra.mxu0 0.0
    %661 = vmatpush.msra.mxu0 0.0
    %662 = vmatpush.msra.mxu0 %v641
    %663 = vmatpush.msra.mxu0 %v640
    %664 = vmatpush.msra.mxu0 %v639
    %665 = vmatpush.msra.mxu0 %v638
    %666 = vmatmul.f32.gmra.mxu0 %v645
    %v667 = vpop.f32.mrf.mxu0
    %v668 = vadd.f32 %v643, %v667
    %669 = vmatmul.f32.gmra.mxu0 %v648
    %v670 = vpop.f32.mrf.mxu0
    %v671 = vadd.f32 %v643, %v670
    %672 = vdwg.mxu0
    %v673 = vld [vmem:[#allocation7 + $0x4] sm:$0x1]
    %v674 = vld [vmem:[#allocation7 + $0x5] sm:$0x1]
    %v675 = vadd.f32 %v668, %v79
    %v676 = vadd.f32 %v671, %v80
    %v677 = vsel %vm87, %v675, 0.0
    %678 = vadd.xlane.f32.xlu0 %v677
    %v679 = vpop.xlane.xlu0 %678
    %v680 = vsel %vm87, %v676, 0.0
    %681 = vadd.xlane.f32.xlu0 %v680
    %v682 = vpop.xlane.xlu0 %681
    %v683 = vrcp.pop 32.0
    %v684 = vmul.f32 32.0, %v683
    %v685 = vsub.f32 1.0, %v684
    %v686 = vmul.f32 %v683, %v685
    %v687 = vadd.f32 %v683, %v686
    %vm688 = vweird.f32 %v683
    %v689 = vsel %vm688, %v683, %v687
    %v690 = vmul.f32 %v679, %v689
    %v691 = vmul.f32 %v682, %v689
    %v692 = vsub.f32 %v675, %v690
    %v693 = vsub.f32 %v676, %v691
    %v694 = vmul.f32 %v692, %v692
    %v695 = vmul.f32 %v693, %v693
    %v696 = vsel %vm87, %v694, 0.0
    %697 = vadd.xlane.f32.xlu0 %v696
    %v698 = vpop.xlane.xlu0 %697
    %v699 = vsel %vm87, %v695, 0.0
    %700 = vadd.xlane.f32.xlu0 %v699
    %v701 = vpop.xlane.xlu0 %700
    %v702 = vmul.f32 %v698, %v689
    %v703 = vmul.f32 %v701, %v689
    %v704 = vadd.f32 %v702, 1e-05
    %v705 = vadd.f32 %v703, 1e-05
    %v706 = vrsqrt.pop %v704
    %v707 = vmul.f32 %v706, %v704
    %v708 = vmul.f32 %v707, %v706
    %v709 = vmul.f32 0.5, %v708
    %v710 = vsub.f32 1.5, %v709
    %v711 = vmul.f32 %v706, %v710
    %vm712 = vweird.f32 %v704
    %vm713 = vweird.f32 %v706
    %vm714 = vmor %vm712, %vm713
    %v715 = vsel %vm714, %v706, %v711
    %v716 = vrsqrt.pop %v705
    %v717 = vmul.f32 %v716, %v705
    %v718 = vmul.f32 %v717, %v716
    %v719 = vmul.f32 0.5, %v718
    %v720 = vsub.f32 1.5, %v719
    %v721 = vmul.f32 %v716, %v720
    %vm722 = vweird.f32 %v705
    %vm723 = vweird.f32 %v716
    %vm724 = vmor %vm722, %vm723
    %v725 = vsel %vm724, %v716, %v721
    %v726 = vmul.f32 %v692, %v715
    %v727 = vmul.f32 %v693, %v725
    %v728 = vperm.slane %v673, 0
    %v729 = vmul.f32 %v726, %v728
    %v730 = vmul.f32 %v727, %v728
    %v731 = vperm.slane %v674, 0
    %v732 = vadd.f32 %v729, %v731
    %v733 = vadd.f32 %v730, %v731
    %v734 = vld [vmem:[#allocation5 + $0x10] sm:$0xff]
    %v735 = vld [vmem:[#allocation5 + $0x30] sm:$0xff]
    %v736 = vld [vmem:[#allocation5 + $0x50] sm:$0xff]
    %v737 = vld [vmem:[#allocation5 + $0x70] sm:$0xff]
    %v738 = vld [vmem:[#allocation7 + $0x2] sm:$0x1]
    %v739 = vld [vmem:[#allocation5 + $0x18] sm:$0xff]
    %v740 = vld [vmem:[#allocation5 + $0x38] sm:$0xff]
    %v741 = vld [vmem:[#allocation5 + $0x58] sm:$0xff]
    %v742 = vld [vmem:[#allocation5 + $0x78] sm:$0xff]
    %v743 = vld [vmem:[#allocation7 + $0x3] sm:$0x1]
    %v744 = vperm.slane %v738, 0
    %v746 = vsel %vm87, %v732, 0
    %v749 = vsel %vm87, %v733, 0
    %751 = vmatpush.msra.mxu0 0.0
    %752 = vmatpush.msra.mxu0 0.0
    %753 = vmatpush.msra.mxu0 0.0
    %754 = vmatpush.msra.mxu0 0.0
    %755 = vmatpush.msra.mxu0 0.0
    %756 = vmatpush.msra.mxu0 0.0
    %757 = vmatpush.msra.mxu0 0.0
    %758 = vmatpush.msra.mxu0 0.0
    %759 = vmatpush.msra.mxu0 0.0
    %760 = vmatpush.msra.mxu0 0.0
    %761 = vmatpush.msra.mxu0 0.0
    %762 = vmatpush.msra.mxu0 0.0
    %763 = vmatpush.msra.mxu0 %v737
    %764 = vmatpush.msra.mxu0 %v736
    %765 = vmatpush.msra.mxu0 %v735
    %766 = vmatpush.msra.mxu0 %v734
    %767 = vmatmul.f32.gmra.mxu0 %v746
    %v768 = vpop.f32.mrf.mxu0
    %v769 = vadd.f32 %v744, %v768
    %770 = vmatmul.f32.gmra.mxu0 %v749
    %v771 = vpop.f32.mrf.mxu0
    %v772 = vadd.f32 %v744, %v771
    %773 = vdwg.mxu0
    %v774 = vmax.f32 %v769, 0.0
    %v775 = vmax.f32 %v772, 0.0
    %v776 = vperm.slane %v743, 0
    %v778 = vsel %vm87, %v774, 0
    %v781 = vsel %vm87, %v775, 0
    %783 = vmatpush.msra.mxu0 0.0
    %784 = vmatpush.msra.mxu0 0.0
    %785 = vmatpush.msra.mxu0 0.0
    %786 = vmatpush.msra.mxu0 0.0
    %787 = vmatpush.msra.mxu0 0.0
    %788 = vmatpush.msra.mxu0 0.0
    %789 = vmatpush.msra.mxu0 0.0
    %790 = vmatpush.msra.mxu0 0.0
    %791 = vmatpush.msra.mxu0 0.0
    %792 = vmatpush.msra.mxu0 0.0
    %793 = vmatpush.msra.mxu0 0.0
    %794 = vmatpush.msra.mxu0 0.0
    %795 = vmatpush.msra.mxu0 %v742
    %796 = vmatpush.msra.mxu0 %v741
    %797 = vmatpush.msra.mxu0 %v740
    %798 = vmatpush.msra.mxu0 %v739
    %799 = vmatmul.f32.gmra.mxu0 %v778
    %v800 = vpop.f32.mrf.mxu0
    %v801 = vadd.f32 %v776, %v800
    %802 = vmatmul.f32.gmra.mxu0 %v781
    %v803 = vpop.f32.mrf.mxu0
    %v804 = vadd.f32 %v776, %v803
    %805 = vdwg.mxu0
    %v806 = vld [vmem:[#allocation7 + $0x6] sm:$0x1]
    %v807 = vld [vmem:[#allocation7 + $0x7] sm:$0x1]
    %v808 = vadd.f32 %v732, %v801
    %v809 = vadd.f32 %v733, %v804
    %v810 = vsel %vm87, %v808, 0.0
    %811 = vadd.xlane.f32.xlu0 %v810
    %v812 = vpop.xlane.xlu0 %811
    %v813 = vsel %vm87, %v809, 0.0
    %814 = vadd.xlane.f32.xlu0 %v813
    %v815 = vpop.xlane.xlu0 %814
    %v816 = vmul.f32 %v812, %v689
    %v817 = vmul.f32 %v815, %v689
    %v818 = vsub.f32 %v808, %v816
    %v819 = vsub.f32 %v809, %v817
    %v820 = vmul.f32 %v818, %v818
    %v821 = vmul.f32 %v819, %v819
    %v822 = vsel %vm87, %v820, 0.0
    %823 = vadd.xlane.f32.xlu0 %v822
    %v824 = vpop.xlane.xlu0 %823
    %v825 = vsel %vm87, %v821, 0.0
    %826 = vadd.xlane.f32.xlu0 %v825
    %v827 = vpop.xlane.xlu0 %826
    %v828 = vmul.f32 %v824, %v689
    %v829 = vmul.f32 %v827, %v689
    %v830 = vadd.f32 %v828, 1e-05
    %v831 = vadd.f32 %v829, 1e-05
    %v832 = vrsqrt.pop %v830
    %v833 = vmul.f32 %v832, %v830
    %v834 = vmul.f32 %v833, %v832
    %v835 = vmul.f32 0.5, %v834
    %v836 = vsub.f32 1.5, %v835
    %v837 = vmul.f32 %v832, %v836
    %vm838 = vweird.f32 %v830
    %vm839 = vweird.f32 %v832
    %vm840 = vmor %vm838, %vm839
    %v841 = vsel %vm840, %v832, %v837
    %v842 = vrsqrt.pop %v831
    %v843 = vmul.f32 %v842, %v831
    %v844 = vmul.f32 %v843, %v842
    %v845 = vmul.f32 0.5, %v844
    %v846 = vsub.f32 1.5, %v845
    %v847 = vmul.f32 %v842, %v846
    %vm848 = vweird.f32 %v831
    %vm849 = vweird.f32 %v842
    %vm850 = vmor %vm848, %vm849
    %v851 = vsel %vm850, %v842, %v847
    %v852 = vmul.f32 %v818, %v841
    %v853 = vmul.f32 %v819, %v851
    %v854 = vperm.slane %v806, 0
    %v855 = vmul.f32 %v852, %v854
    %v856 = vmul.f32 %v853, %v854
    %v857 = vperm.slane %v807, 0
    %v858 = vadd.f32 %v855, %v857
    %v859 = vadd.f32 %v856, %v857
    %860 = vst.msk [vmem:[#allocation10] sm:$0xff] %vm87, %v858
    %861 = vst.msk [vmem:[#allocation10 + $0x8] sm:$0xff] %vm87, %v859
    // Predicated region
    $region34: #{mha_forward.1} parent=1 // pred_check
      _
    $region35: #{mha_forward.1} parent=1 // pred_check_branch
      %863 = sbr.rel (0) target = $region37
    $region36: #{mha_forward.1} parent=1 // pred_region
      %865 = vsyncadd [#allocation4], 0
      %s866 = sshll.u32 [#allocation10], 4
      %s867 = int_to_ptr.vmem [resolvable:$true] %s866
      %s868 = sshll.u32 %s4, 4
      %s869 = int_to_ptr.hbm [resolvable:$true] %s868
      %874 = dma.vmem_to_hbm [thread:$0]  %s867, 256, %s869, [#allocation4], 128, 128, 8
    $region37: #{mha_forward.1} parent=1 // pred_fallthru
      _
    // Predicated region
    $region38: #{mha_forward.1} parent=1 // pred_check
      _
    $region39: #{mha_forward.1} parent=1 // pred_check_branch
      %876 = sbr.rel (0) target = $region41
    $region40: #{mha_forward.1} parent=1 // pred_region
      %878 = dma.done [#allocation4], 256
    $region41: #{mha_forward.1} parent=1 // pred_fallthru
      _
    %879 = vsyncpa [#allocation3], 1
    %880 = vsyncpa [#allocation6], 1
    %881 = vsyncpa [#allocation9], 1
    %882 = vsyncpa [#allocation4], 1

</llo_original>
